<compile_context>
chip_gen: v7x
topology: tpu7x:2x2x1
jax: 0.10.0
libtpu: 0.0.40
codegen_flags: <defaults>
</compile_context>

<pallas_src>
import functools

import jax
import jax.numpy as jnp
from jax.experimental import pallas as pl
from jax.experimental.pallas import tpu as pltpu

LN_EPS = 1e-5
LANE = 128
SUBLANE = 8
VMEM_BUDGET = 24 << 20  # conservative pipelined-working-set budget (all gens)


def _round_up(v, m):
    return ((v + m - 1) // m) * m


def _fused_layernorm(h, gamma, beta, n_valid):
    # One-pass LN: a single sum / sum-of-squares reduction pair.  Padded lanes
    # of h are exactly zero, so reducing over the full padded lane width and
    # dividing by the true feature count is exact.
    inv_n = 1.0 / float(n_valid)
    s = jnp.sum(h, axis=-1, keepdims=True)
    ss = jnp.sum(h * h, axis=-1, keepdims=True)
    mean = s * inv_n
    var = ss * inv_n - mean * mean
    inv = jax.lax.rsqrt(var + LN_EPS)
    return (h - mean) * (inv * gamma) + beta


def preprocessor_kernel(x_ref, w1_ref, w2_ref, p_ref, o_ref, *, h_true):
    """Fused Linear->LN->ReLU (x2). p_ref rows: 0=b1, 1=b2, 2=gamma, 3=beta."""
    p = p_ref[...]
    b1, b2 = p[0:1, :], p[1:2, :]
    gamma, beta = p[2:3, :], p[3:4, :]

    w_dtype = w1_ref.dtype
    x = x_ref[...].astype(w_dtype)          # no-op when compute dtype == f32

    # Layer 1: Linear(in, hidden) -> LayerNorm -> ReLU -> Dropout(identity)
    h = jnp.dot(x, w1_ref[...], preferred_element_type=jnp.float32) + b1
    h = _fused_layernorm(h, gamma, beta, h_true)
    h = jnp.maximum(h, 0.0)

    # Layer 2: Linear(hidden, hidden) -> LayerNorm -> ReLU -> Dropout(identity)
    h = jnp.dot(h.astype(w_dtype), w2_ref[...],
                preferred_element_type=jnp.float32) + b2
    h = _fused_layernorm(h, gamma, beta, h_true)
    h = jnp.maximum(h, 0.0)

    if h_true != h.shape[-1]:
        h = h[:, :h_true]                    # drop zero lane-padding pre-store
    o_ref[...] = h.astype(o_ref.dtype)


def prepare_params(w1, b1, w2, b2, gamma, beta, *, compute_dtype=jnp.bfloat16):
    """One-time parameter prep (call at init, NOT per forward): zero-pad the
    hidden dim to 128 lanes, cast matmul weights to compute_dtype, and pack
    the four (H,) vectors into a single (8, H_p) f32 operand."""
    in_dim, hidden = w1.shape
    h_pad = _round_up(hidden, LANE)
    w1p = jnp.pad(w1, ((0, 0), (0, h_pad - hidden))).astype(compute_dtype)
    w2p = jnp.pad(w2, ((0, h_pad - hidden),
                       (0, h_pad - hidden))).astype(compute_dtype)
    # All four rows are ZERO-padded (including gamma) so padded lanes stay
    # exactly zero through LN -> ReLU -> the next matmul; this keeps the
    # single-pass LN statistics exact over the padded width.
    packed = jnp.zeros((8, h_pad), jnp.float32)
    packed = packed.at[0, :hidden].set(jnp.ravel(b1).astype(jnp.float32))
    packed = packed.at[1, :hidden].set(jnp.ravel(b2).astype(jnp.float32))
    packed = packed.at[2, :hidden].set(jnp.ravel(gamma).astype(jnp.float32))
    packed = packed.at[3, :hidden].set(jnp.ravel(beta).astype(jnp.float32))
    return w1p, w2p, packed


def _working_set_bytes(tile_m, in_dim, h_out, h_pad, x_itemsize, w_itemsize,
                       weight_bufs):
    x_tile = 2 * tile_m * in_dim * x_itemsize        # double-buffered input
    o_tile = 2 * tile_m * h_out * x_itemsize         # double-buffered output
    weights = weight_bufs * (in_dim * h_pad + h_pad * h_pad) * w_itemsize
    params = 2 * 8 * h_pad * 4
    interm = 3 * tile_m * h_pad * 4                  # f32 hidden temporaries
    return x_tile + o_tile + weights + params + interm


def _choose_tile_m(n_rows, in_dim, h_out, h_pad, x_itemsize, w_itemsize,
                   weight_bufs, max_tile_m, vmem_budget):
    tile = min(_round_up(n_rows, SUBLANE), max_tile_m)
    # >= 2 grid steps when N allows it: lets dimension_semantics=('parallel',)
    # shard rows across v7x's two TensorCores for one extra ~0.35 us step.
    if n_rows > SUBLANE and pl.cdiv(n_rows, tile) < 2:
        tile = _round_up(pl.cdiv(n_rows, 2), SUBLANE)
    # Shrink until the pipelined working set fits the VMEM budget (matters for
    # production-sized IN/H, especially on v7x's 64 MiB VMEM).
    while tile > SUBLANE and _working_set_bytes(
            tile, in_dim, h_out, h_pad, x_itemsize, w_itemsize,
            weight_bufs) > vmem_budget:
        tile = _round_up(tile // 2, SUBLANE)
    return tile


@functools.partial(
    jax.jit,
    static_argnames=("hidden_channels", "max_tile_m", "single_buffer_weights"))
def preprocessor_forward(x, w1p, w2p, packed, *, hidden_channels,
                         max_tile_m=512, single_buffer_weights=False):
    n_rows, in_dim = x.shape
    h_pad = w1p.shape[1]
    h_true = hidden_channels
    assert packed.shape == (8, h_pad)

    weight_bufs = 1 if single_buffer_weights else 2
    w_itemsize = jnp.dtype(w1p.dtype).itemsize
    x_itemsize = jnp.dtype(x.dtype).itemsize

    tile_m = _choose_tile_m(n_rows, in_dim, h_true, h_pad, x_itemsize,
                            w_itemsize, weight_bufs, max_tile_m, VMEM_BUDGET)
    grid = (pl.cdiv(n_rows, tile_m),)

    working_set = _working_set_bytes(tile_m, in_dim, h_true, h_pad, x_itemsize,
                                     w_itemsize, weight_bufs)
    vmem_limit = int(min(48 << 20, max(32 << 20, 2 * working_set)))

    invariant = lambda i: (0, 0)

    def weight_spec(shape):
        # Grid-invariant operands.  pl.Buffered(1) halves their VMEM residency
        # (useful on v7x's 64 MiB VMEM at production-sized H); off by default.
        if single_buffer_weights:
            return pl.BlockSpec(shape, invariant, pipeline_mode=pl.Buffered(1))
        return pl.BlockSpec(shape, invariant)

    flops = 2 * n_rows * (in_dim * h_pad + h_pad * h_pad)
    bytes_accessed = (x.size * x_itemsize + w1p.size * w_itemsize
                      + w2p.size * w_itemsize + packed.size * 4
                      + n_rows * h_true * x_itemsize)

    return pl.pallas_call(
        functools.partial(preprocessor_kernel, h_true=h_true),
        out_shape=jax.ShapeDtypeStruct((n_rows, h_true), x.dtype),
        grid_spec=pltpu.PrefetchScalarGridSpec(
            num_scalar_prefetch=0,
            grid=grid,
            in_specs=[
                # x row tile: last dim equals full IN -> exempt from the
                # 128-lane rule, so no wrapper-side lane padding of x.
                pl.BlockSpec((tile_m, in_dim), lambda i: (i, 0)),
                weight_spec((in_dim, h_pad)),   # W1 (resident across grid)
                weight_spec((h_pad, h_pad)),    # W2 (resident across grid)
                weight_spec((8, h_pad)),        # packed b1/b2/gamma/beta
            ],
            # True (N, H) output written directly: avoids the padded output +
            # wrapper slice (an extra full HBM pass).  When H % 128 != 0 the
            # store is masked, which is far cheaper than the copy it replaces.
            out_specs=pl.BlockSpec((tile_m, h_true), lambda i: (i, 0)),
        ),
        compiler_params=pltpu.CompilerParams(
            dimension_semantics=("parallel",),
            vmem_limit_bytes=vmem_limit,
        ),
        cost_estimate=pl.CostEstimate(
            flops=flops, transcendentals=2 * n_rows,
            bytes_accessed=bytes_accessed),
    )(x, w1p, w2p, packed)


def reference_forward(x, w1, b1, w2, b2, gamma, beta, *,
                      compute_dtype=jnp.float32):
    """Pure-JAX reference mirroring the PyTorch module (eval mode)."""
    def ln(h):
        mean = jnp.mean(h, axis=-1, keepdims=True)
        var = jnp.mean((h - mean) ** 2, axis=-1, keepdims=True)
        return (h - mean) * jax.lax.rsqrt(var + LN_EPS) * gamma + beta

    def dot(a, w):
        return jnp.dot(a.astype(compute_dtype), w.astype(compute_dtype),
                       preferred_element_type=jnp.float32)

    h = dot(x, w1) + b1
    h = jnp.maximum(ln(h), 0.0)
    h = dot(h, w2) + b2
    h = jnp.maximum(ln(h), 0.0)
    return h


if __name__ == "__main__":
    # Small shapes consistent with the module: N tokens, in_channels -> hidden.
    N, IN, H = 64, 16, 32
    key = jax.random.PRNGKey(0)
    kx, kw1, kb1, kw2, kb2 = jax.random.split(key, 5)

    x = jax.random.normal(kx, (N, IN), dtype=jnp.float32)

    # Deterministic params (PyTorch Linear weight is (out,in); stored (in,out)).
    w1 = jax.random.normal(kw1, (IN, H), dtype=jnp.float32) * (1.0 / IN) ** 0.5
    b1 = jax.random.normal(kb1, (H,), dtype=jnp.float32) * 0.01
    w2 = jax.random.normal(kw2, (H, H), dtype=jnp.float32) * (1.0 / H) ** 0.5
    b2 = jax.random.normal(kb2, (H,), dtype=jnp.float32) * 0.01
    # Shared LayerNorm parameters (default init: weight=1, bias=0).
    gamma = jnp.ones((H,), dtype=jnp.float32)
    beta = jnp.zeros((H,), dtype=jnp.float32)

    # One-time parameter preparation (padding + bf16 cast hoisted out of the
    # per-call forward, per the perf review).
    compute_dtype = jnp.bfloat16
    w1p, w2p, packed = prepare_params(w1, b1, w2, b2, gamma, beta,
                                      compute_dtype=compute_dtype)

    out = preprocessor_forward(x, w1p, w2p, packed, hidden_channels=H)
    out = jax.block_until_ready(out)
    assert out.shape == (N, H)

    # Matched-precision reference (same bf16 matmul inputs): tight tolerance
    # validates the fused kernel structure (LN / ReLU / tiling).
    ref_matched = reference_forward(x, w1, b1, w2, b2, gamma, beta,
                                    compute_dtype=compute_dtype)
    assert jnp.allclose(out, ref_matched, atol=5e-3, rtol=5e-3), \
        "mismatch vs matched-precision reference"

    # Full-f32 (PyTorch-equivalent) reference: loose tolerance bounds the
    # deliberate bf16 quantization of the matmul inputs.
    ref_f32 = reference_forward(x, w1, b1, w2, b2, gamma, beta,
                                compute_dtype=jnp.float32)
    assert jnp.allclose(out, ref_f32, atol=1e-1, rtol=1e-1), \
        "mismatch vs f32 reference"

    print("KERNEL_OK")
</pallas_src>

<mosaic_0001>
module attributes {stable_mosaic.version = 11 : i64} {
  func.func @preprocessor_kernel(%arg0: i32, %arg1: memref<32x16xf32, #tpu.memory_space<vmem>>, %arg2: memref<16x128xbf16, #tpu.memory_space<vmem>>, %arg3: memref<128x128xbf16, #tpu.memory_space<vmem>>, %arg4: memref<8x128xf32, #tpu.memory_space<vmem>>, %arg5: memref<32x32xf32, #tpu.memory_space<vmem>>) attributes {dimension_semantics = [#tpu.dimension_semantics<parallel>], iteration_bounds = array<i64: 2>, scalar_prefetch = 0 : i64, scratch_operands = 0 : i64, tpu.core_type = #tpu.core_type<tc>, window_params = [{transform_indices = @transform_0, window_bounds = array<i64: 32, 16>}, {pipeline_mode = #tpu.pipeline_mode<synchronous>, transform_indices = @transform_1, window_bounds = array<i64: 16, 128>}, {pipeline_mode = #tpu.pipeline_mode<synchronous>, transform_indices = @transform_2, window_bounds = array<i64: 128, 128>}, {pipeline_mode = #tpu.pipeline_mode<synchronous>, transform_indices = @transform_3, window_bounds = array<i64: 8, 128>}, {transform_indices = @transform_4, window_bounds = array<i64: 32, 32>}]} {
    %c0 = arith.constant 0 : index
    %c0_0 = arith.constant 0 : index
    %0 = vector.load %arg4[%c0, %c0_0] : memref<8x128xf32, #tpu.memory_space<vmem>>, vector<8x128xf32>
    %1 = vector.extract_strided_slice %0 {offsets = [0, 0], sizes = [1, 128], strides = [1, 1]} : vector<8x128xf32> to vector<1x128xf32>
    %2 = vector.extract_strided_slice %0 {offsets = [1, 0], sizes = [1, 128], strides = [1, 1]} : vector<8x128xf32> to vector<1x128xf32>
    %3 = vector.extract_strided_slice %0 {offsets = [2, 0], sizes = [1, 128], strides = [1, 1]} : vector<8x128xf32> to vector<1x128xf32>
    %4 = vector.extract_strided_slice %0 {offsets = [3, 0], sizes = [1, 128], strides = [1, 1]} : vector<8x128xf32> to vector<1x128xf32>
    %c0_1 = arith.constant 0 : index
    %c0_2 = arith.constant 0 : index
    %5 = vector.load %arg1[%c0_1, %c0_2] : memref<32x16xf32, #tpu.memory_space<vmem>>, vector<32x16xf32>
    %6 = arith.truncf %5 : vector<32x16xf32> to vector<32x16xbf16>
    %c0_3 = arith.constant 0 : index
    %c0_4 = arith.constant 0 : index
    %7 = vector.load %arg2[%c0_3, %c0_4] : memref<16x128xbf16, #tpu.memory_space<vmem>>, vector<16x128xbf16>
    %cst = arith.constant dense<0.000000e+00> : vector<32x128xf32>
    %8 = tpu.matmul %6, %7, %cst {dimension_numbers = #tpu.dot_dimension_numbers<[1], [0], [0], [1], [0, 0, 1, 1], [], []>} : vector<32x16xbf16>, vector<16x128xbf16>, vector<32x128xf32> -> vector<32x128xf32>
    %9 = vector.broadcast %1 : vector<1x128xf32> to vector<32x128xf32>
    %10 = arith.addf %8, %9 : vector<32x128xf32>
    %cst_5 = arith.constant dense<0.000000e+00> : vector<32xf32>
    %11 = vector.multi_reduction <add>, %10, %cst_5 [1] : vector<32x128xf32> to vector<32xf32>
    %12 = vector.shape_cast %11 : vector<32xf32> to vector<32x1xf32>
    %13 = arith.mulf %10, %10 : vector<32x128xf32>
    %cst_6 = arith.constant dense<0.000000e+00> : vector<32xf32>
    %14 = vector.multi_reduction <add>, %13, %cst_6 [1] : vector<32x128xf32> to vector<32xf32>
    %15 = vector.shape_cast %14 : vector<32xf32> to vector<32x1xf32>
    %cst_7 = arith.constant 3.125000e-02 : f32
    %16 = vector.broadcast %cst_7 : f32 to vector<32x1xf32>
    %17 = arith.mulf %12, %16 : vector<32x1xf32>
    %cst_8 = arith.constant 3.125000e-02 : f32
    %18 = vector.broadcast %cst_8 : f32 to vector<32x1xf32>
    %19 = arith.mulf %15, %18 : vector<32x1xf32>
    %20 = arith.mulf %17, %17 : vector<32x1xf32>
    %21 = arith.subf %19, %20 : vector<32x1xf32>
    %cst_9 = arith.constant 9.99999974E-6 : f32
    %22 = vector.broadcast %cst_9 : f32 to vector<32x1xf32>
    %23 = arith.addf %21, %22 : vector<32x1xf32>
    %24 = math.rsqrt %23 : vector<32x1xf32>
    %25 = vector.broadcast %17 : vector<32x1xf32> to vector<32x128xf32>
    %26 = arith.subf %10, %25 : vector<32x128xf32>
    %27 = vector.broadcast %24 : vector<32x1xf32> to vector<32x128xf32>
    %28 = vector.broadcast %3 : vector<1x128xf32> to vector<32x128xf32>
    %29 = arith.mulf %27, %28 : vector<32x128xf32>
    %30 = arith.mulf %26, %29 : vector<32x128xf32>
    %31 = vector.broadcast %4 : vector<1x128xf32> to vector<32x128xf32>
    %32 = arith.addf %30, %31 : vector<32x128xf32>
    %cst_10 = arith.constant 0.000000e+00 : f32
    %33 = vector.broadcast %cst_10 : f32 to vector<32x128xf32>
    %34 = arith.maximumf %32, %33 : vector<32x128xf32>
    %35 = arith.truncf %34 : vector<32x128xf32> to vector<32x128xbf16>
    %c0_11 = arith.constant 0 : index
    %c0_12 = arith.constant 0 : index
    %36 = vector.load %arg3[%c0_11, %c0_12] : memref<128x128xbf16, #tpu.memory_space<vmem>>, vector<128x128xbf16>
    %cst_13 = arith.constant dense<0.000000e+00> : vector<32x128xf32>
    %37 = tpu.matmul %35, %36, %cst_13 {dimension_numbers = #tpu.dot_dimension_numbers<[1], [0], [0], [1], [0, 0, 1, 1], [], []>} : vector<32x128xbf16>, vector<128x128xbf16>, vector<32x128xf32> -> vector<32x128xf32>
    %38 = vector.broadcast %2 : vector<1x128xf32> to vector<32x128xf32>
    %39 = arith.addf %37, %38 : vector<32x128xf32>
    %cst_14 = arith.constant dense<0.000000e+00> : vector<32xf32>
    %40 = vector.multi_reduction <add>, %39, %cst_14 [1] : vector<32x128xf32> to vector<32xf32>
    %41 = vector.shape_cast %40 : vector<32xf32> to vector<32x1xf32>
    %42 = arith.mulf %39, %39 : vector<32x128xf32>
    %cst_15 = arith.constant dense<0.000000e+00> : vector<32xf32>
    %43 = vector.multi_reduction <add>, %42, %cst_15 [1] : vector<32x128xf32> to vector<32xf32>
    %44 = vector.shape_cast %43 : vector<32xf32> to vector<32x1xf32>
    %cst_16 = arith.constant 3.125000e-02 : f32
    %45 = vector.broadcast %cst_16 : f32 to vector<32x1xf32>
    %46 = arith.mulf %41, %45 : vector<32x1xf32>
    %cst_17 = arith.constant 3.125000e-02 : f32
    %47 = vector.broadcast %cst_17 : f32 to vector<32x1xf32>
    %48 = arith.mulf %44, %47 : vector<32x1xf32>
    %49 = arith.mulf %46, %46 : vector<32x1xf32>
    %50 = arith.subf %48, %49 : vector<32x1xf32>
    %cst_18 = arith.constant 9.99999974E-6 : f32
    %51 = vector.broadcast %cst_18 : f32 to vector<32x1xf32>
    %52 = arith.addf %50, %51 : vector<32x1xf32>
    %53 = math.rsqrt %52 : vector<32x1xf32>
    %54 = vector.broadcast %46 : vector<32x1xf32> to vector<32x128xf32>
    %55 = arith.subf %39, %54 : vector<32x128xf32>
    %56 = vector.broadcast %53 : vector<32x1xf32> to vector<32x128xf32>
    %57 = vector.broadcast %3 : vector<1x128xf32> to vector<32x128xf32>
    %58 = arith.mulf %56, %57 : vector<32x128xf32>
    %59 = arith.mulf %55, %58 : vector<32x128xf32>
    %60 = vector.broadcast %4 : vector<1x128xf32> to vector<32x128xf32>
    %61 = arith.addf %59, %60 : vector<32x128xf32>
    %cst_19 = arith.constant 0.000000e+00 : f32
    %62 = vector.broadcast %cst_19 : f32 to vector<32x128xf32>
    %63 = arith.maximumf %61, %62 : vector<32x128xf32>
    %64 = vector.extract_strided_slice %63 {offsets = [0, 0], sizes = [32, 32], strides = [1, 1]} : vector<32x128xf32> to vector<32x32xf32>
    %c0_20 = arith.constant 0 : index
    %c0_21 = arith.constant 0 : index
    %65 = vector.load %arg5[%c0_20, %c0_21] : memref<32x32xf32, #tpu.memory_space<vmem>>, vector<32x32xf32>
    tpu.vector_store %arg5[%c0_20, %c0_21], %64 {strides = array<i32>} : memref<32x32xf32, #tpu.memory_space<vmem>>, vector<32x32xf32>,
    return
  }
  func.func @transform_0(%arg0: i32) -> (i32, i32) {
    %c0_i32 = arith.constant 0 : i32
    %c0_i32_0 = arith.constant 0 : i32
    return %arg0, %c0_i32 : i32, i32
  }
  func.func @transform_1(%arg0: i32) -> (i32, i32) {
    %c0_i32 = arith.constant 0 : i32
    %c0_i32_0 = arith.constant 0 : i32
    %c0_i32_1 = arith.constant 0 : i32
    return %c0_i32, %c0_i32_0 : i32, i32
  }
  func.func @transform_2(%arg0: i32) -> (i32, i32) {
    %c0_i32 = arith.constant 0 : i32
    %c0_i32_0 = arith.constant 0 : i32
    %c0_i32_1 = arith.constant 0 : i32
    return %c0_i32, %c0_i32_0 : i32, i32
  }
  func.func @transform_3(%arg0: i32) -> (i32, i32) {
    %c0_i32 = arith.constant 0 : i32
    %c0_i32_0 = arith.constant 0 : i32
    %c0_i32_1 = arith.constant 0 : i32
    return %c0_i32, %c0_i32_0 : i32, i32
  }
  func.func @transform_4(%arg0: i32) -> (i32, i32) {
    %c0_i32 = arith.constant 0 : i32
    %c0_i32_0 = arith.constant 0 : i32
    return %arg0, %c0_i32 : i32, i32
  }
}

</mosaic_0001>

<llo_original>
// kernel: preprocessor_forward.1
$region0: #{preprocessor_forward.1}
  #allocation0 [shape = 'u32[]', space=smem, size = 0x4, offset = 0x4, fixed_abs, tag = 'smem constant byte address 0x4 - core index']
  #allocation1 [shape = 'u32[144,128]{1,0:T(1,128)}', space=vmem, size = 0x12000, scoped, tag = 'internal scratch']
  %s0 = inlined_call_operand.vmem [shape: f32[64,16], index: 0, kind: input, shape index: {}]
  %s1 = inlined_call_operand.vmem [shape: bf16[16,128], index: 1, kind: input, shape index: {}]
  %s2 = inlined_call_operand.vmem [shape: bf16[128,128], index: 2, kind: input, shape index: {}]
  %s3 = inlined_call_operand.vmem [shape: f32[8,128], index: 3, kind: input, shape index: {}]
  %s4 = inlined_call_operand.vmem [shape: f32[64,32], index: 4, kind: output, shape index: {}]
  %s5 = sld [smem:[#allocation0]]
  $region49: #{preprocessor_forward.1} parent=0
    _
  %s7 = ssub.s32 1, %s5
  %s8 = scalar_select 0, %s7, %s5
  loop: start=0, step=1, limit=4
  $region2: #{preprocessor_forward.1} parent=0 // loop_pre_header
    _
  $region3: #{preprocessor_forward.1} parent=0 // loop_header
    %s10 = sphi 0, %s14
    %p11 = scmp.ge.s32.totalorder %s10, 4
    %s20 = sphi 0, %s22
    %s23 = sphi 0, %s20
    %s24 = sphi 0, %s23
    %s40 = sphi 0, %s24
    %s44 = sphi 0, %s44
    %s46 = sphi 0, %s44
    %s47 = sphi 0, %s46
    %s61 = sphi 0, %s47
    %s65 = sphi 0, %s65
    %s67 = sphi 0, %s65
    %s68 = sphi 0, %s67
    %s82 = sphi 0, %s68
    %s86 = sphi 0, %s86
    %s88 = sphi 0, %s86
    %s89 = sphi 0, %s88
    %s103 = sphi 0, %s89
    %s109 = sphi 0, %s111
    %s112 = sphi 0, %s109
    %s113 = sphi 0, %s112
    %s129 = sphi 0, %s113
  $region4: #{preprocessor_forward.1} parent=0 // loop_header_branch
    %13 = sbr.rel (%p11) target = $region8
  $region5: #{preprocessor_forward.1} parent=0 // loop_body
    %s15 = ssub.s32 %s10, 1
    %s16 = ssub.s32 %s10, 2
    %s17 = sadd.s32 %s10, 1
    %s18 = ssub.s32 %s10, %s17
    %p19 = scmp.eq.s32.totalorder %s18, 0
    %s21 = sadd.s32 %s20, 1
    %s22 = scalar_select %p19, %s20, %s21
    %p25 = pneg %p19
    %p26 = scmp.eq.s32.totalorder %s10, 1
    %p27 = por %p25, %p26
    %p28 = scmp.ne.s32.totalorder %s20, %s23
    %p29 = scmp.eq.s32.totalorder %s10, 0
    %p30 = por %p28, %p29
    %p31 = scmp.ne.s32.totalorder %s20, %s23
    %p32 = scmp.eq.s32.totalorder %s15, 1
    %p33 = por %p31, %p32
    %p34 = scmp.ne.s32.totalorder %s23, %s24
    %p35 = scmp.eq.s32.totalorder %s15, 0
    %p36 = por %p34, %p35
    %p37 = scmp.ne.s32.totalorder %s23, %s24
    %p38 = scmp.eq.s32.totalorder %s16, 1
    %p39 = por %p37, %p38
    %p41 = scmp.ne.s32.totalorder %s24, %s40
    %p42 = scmp.eq.s32.totalorder %s16, 0
    %p43 = por %p41, %p42
    %s45 = sadd.s32 %s44, 1
    %p48 = scmp.eq.s32.totalorder %s10, 1
    %p49 = scmp.ne.s32.totalorder %s44, %s46
    %p50 = scmp.eq.s32.totalorder %s10, 0
    %p51 = por %p49, %p50
    %p52 = scmp.ne.s32.totalorder %s44, %s46
    %p53 = scmp.eq.s32.totalorder %s15, 1
    %p54 = por %p52, %p53
    %p55 = scmp.ne.s32.totalorder %s46, %s47
    %p56 = scmp.eq.s32.totalorder %s15, 0
    %p57 = por %p55, %p56
    %p58 = scmp.ne.s32.totalorder %s46, %s47
    %p59 = scmp.eq.s32.totalorder %s16, 1
    %p60 = por %p58, %p59
    %p62 = scmp.ne.s32.totalorder %s47, %s61
    %p63 = scmp.eq.s32.totalorder %s16, 0
    %p64 = por %p62, %p63
    %s66 = sadd.s32 %s65, 1
    %p69 = scmp.eq.s32.totalorder %s10, 1
    %p70 = scmp.ne.s32.totalorder %s65, %s67
    %p71 = scmp.eq.s32.totalorder %s10, 0
    %p72 = por %p70, %p71
    %p73 = scmp.ne.s32.totalorder %s65, %s67
    %p74 = scmp.eq.s32.totalorder %s15, 1
    %p75 = por %p73, %p74
    %p76 = scmp.ne.s32.totalorder %s67, %s68
    %p77 = scmp.eq.s32.totalorder %s15, 0
    %p78 = por %p76, %p77
    %p79 = scmp.ne.s32.totalorder %s67, %s68
    %p80 = scmp.eq.s32.totalorder %s16, 1
    %p81 = por %p79, %p80
    %p83 = scmp.ne.s32.totalorder %s68, %s82
    %p84 = scmp.eq.s32.totalorder %s16, 0
    %p85 = por %p83, %p84
    %s87 = sadd.s32 %s86, 1
    %p90 = scmp.eq.s32.totalorder %s10, 1
    %p91 = scmp.ne.s32.totalorder %s86, %s88
    %p92 = scmp.eq.s32.totalorder %s10, 0
    %p93 = por %p91, %p92
    %p94 = scmp.ne.s32.totalorder %s86, %s88
    %p95 = scmp.eq.s32.totalorder %s15, 1
    %p96 = por %p94, %p95
    %p97 = scmp.ne.s32.totalorder %s88, %s89
    %p98 = scmp.eq.s32.totalorder %s15, 0
    %p99 = por %p97, %p98
    %p100 = scmp.ne.s32.totalorder %s88, %s89
    %p101 = scmp.eq.s32.totalorder %s16, 1
    %p102 = por %p100, %p101
    %p104 = scmp.ne.s32.totalorder %s89, %s103
    %p105 = scmp.eq.s32.totalorder %s16, 0
    %p106 = por %p104, %p105
    %s107 = ssub.s32 %s10, %s17
    %p108 = scmp.eq.s32.totalorder %s107, 0
    %s110 = sadd.s32 %s109, 1
    %s111 = scalar_select %p108, %s109, %s110
    %p114 = pneg %p108
    %p115 = scmp.eq.s32.totalorder %s10, 1
    %p116 = por %p114, %p115
    %p117 = scmp.ne.s32.totalorder %s109, %s112
    %p118 = scmp.eq.s32.totalorder %s10, 0
    %p119 = por %p117, %p118
    %p120 = scmp.ne.s32.totalorder %s109, %s112
    %p121 = scmp.eq.s32.totalorder %s15, 1
    %p122 = por %p120, %p121
    %p123 = scmp.ne.s32.totalorder %s112, %s113
    %p124 = scmp.eq.s32.totalorder %s15, 0
    %p125 = por %p123, %p124
    %p126 = scmp.ne.s32.totalorder %s112, %s113
    %p127 = scmp.eq.s32.totalorder %s16, 1
    %p128 = por %p126, %p127
    %p130 = scmp.ne.s32.totalorder %s113, %s129
    %p131 = scmp.eq.s32.totalorder %s16, 0
    %p132 = por %p130, %p131
    %p133 = scmp.le.s32.totalorder 1, %s10
    %p134 = scmp.lt.s32.totalorder %s10, 3
    %p135 = pnand %p133, %p134
    %p136 = pneg %p135
    // Predicated region
    $region9: #{preprocessor_forward.1} parent=5 // pred_check
      _
    $region10: #{preprocessor_forward.1} parent=5 // pred_check_branch
      %138 = sbr.rel (%p135) target = $region12
    $region11: #{preprocessor_forward.1} parent=5 // pred_region
      %s139 = ssub.s32 %s10, 1
      // Predicated region
      $region13: #{preprocessor_forward.1} parent=11 // pred_check
        %p140 = pneg %p57
      $region14: #{preprocessor_forward.1} parent=11 // pred_check_branch
        %142 = sbr.rel (%p140) target = $region16
      $region15: #{preprocessor_forward.1} parent=11 // pred_region
        _
      $region16: #{preprocessor_forward.1} parent=11 // pred_fallthru
        _
      // Predicated region
      $region17: #{preprocessor_forward.1} parent=11 // pred_check
        %p143 = pneg %p78
      $region18: #{preprocessor_forward.1} parent=11 // pred_check_branch
        %145 = sbr.rel (%p143) target = $region20
      $region19: #{preprocessor_forward.1} parent=11 // pred_region
        _
      $region20: #{preprocessor_forward.1} parent=11 // pred_fallthru
        _
      // Predicated region
      $region21: #{preprocessor_forward.1} parent=11 // pred_check
        %p146 = pneg %p99
      $region22: #{preprocessor_forward.1} parent=11 // pred_check_branch
        %148 = sbr.rel (%p146) target = $region24
      $region23: #{preprocessor_forward.1} parent=11 // pred_region
        _
      $region24: #{preprocessor_forward.1} parent=11 // pred_fallthru
        _
    $region12: #{preprocessor_forward.1} parent=5 // pred_fallthru
      _
    %p149 = scmp.lt.s32.totalorder %s10, 2
    // Predicated region
    $region25: #{preprocessor_forward.1} parent=5 // pred_check
      %p150 = pneg %p149
    $region26: #{preprocessor_forward.1} parent=5 // pred_check_branch
      %152 = sbr.rel (%p150) target = $region28
    $region27: #{preprocessor_forward.1} parent=5 // pred_region
      // Predicated region
      $region29: #{preprocessor_forward.1} parent=27 // pred_check
        %p153 = pneg %p30
      $region30: #{preprocessor_forward.1} parent=27 // pred_check_branch
        %155 = sbr.rel (%p153) target = $region32
      $region31: #{preprocessor_forward.1} parent=27 // pred_region
        %s156 = smul.u32 4, %s10
        %p157 = scmp.lt.s32.totalorder %s156, 7
        %s158 = scalar_select %p157, %s156, 7
        %s159 = smul.addr %s158, 8
        %s160 = scalar_lea.vmem %s0, %s159
        %s161 = smul.u32 4, %s10
      $region32: #{preprocessor_forward.1} parent=27 // pred_fallthru
        _
    $region28: #{preprocessor_forward.1} parent=5 // pred_fallthru
      _
    %p162 = scmp.le.s32.totalorder 1, %s10
    %p163 = scmp.lt.s32.totalorder %s10, 3
    %p164 = pnand %p162, %p163
    %p165 = pneg %p164
    // Predicated region
    $region33: #{preprocessor_forward.1} parent=5 // pred_check
      _
    $region34: #{preprocessor_forward.1} parent=5 // pred_check_branch
      %167 = sbr.rel (%p164) target = $region36
    $region35: #{preprocessor_forward.1} parent=5 // pred_region
      %s168 = ssub.s32 %s10, 1
      %s169 = smul.u32 4, %s15
      %p170 = scmp.lt.s32.totalorder %s169, 7
      %s171 = scalar_select %p170, %s169, 7
      %s172 = smul.addr %s171, 8
      %s173 = scalar_lea.vmem %s0, %s172
      %p174 = pneg %p36
      %p175 = pneg %p33
      %p176 = pneg %p57
      %p177 = pneg %p54
      %p178 = pneg %p78
      %p179 = pneg %p75
      %p180 = pneg %p99
      %p181 = pneg %p96
      %p182 = pneg %p125
      %p183 = pneg %p122
      %s184 = smul.u32 4, %s15
      %p185 = scmp.lt.s32.totalorder %s184, 7
      %s186 = scalar_select %p185, %s184, 7
      %s187 = smul.addr %s186, 8
      %s188 = scalar_lea.vmem %s4, %s187
      %s189 = smul.u32 4, %s15
      %p190 = scmp.lt.s32.totalorder %s189, 7
      %s191 = scalar_select %p190, %s189, 7
      %s192 = smul.addr %s191, 8
      %s193 = scalar_lea.vmem %s0, %s192
      %s194 = smul.u32 4, %s15
      %s195 = smul.u32 4, %s15
      %p196 = scmp.lt.s32.totalorder %s195, 7
      %s197 = scalar_select %p196, %s195, 7
      %s198 = smul.addr %s197, 8
      %s199 = scalar_lea.vmem %s4, %s198
      %s200 = smul.u32 4, %s15
      %v202 = vld [vmem:[%s3] sm:$0xff]
      %v203 = vld [vmem:[%s193] sm:$0xff]
      %v204 = vld [vmem:[%s193 + $0x8] sm:$0xff]
      %v205 = vld [vmem:[%s193 + $0x10] sm:$0xff]
      %v206 = vld [vmem:[%s193 + $0x18] sm:$0xff]
      %v207 = vpack.c.bf16 %v204, %v203
      %v208 = vpack.c.bf16 %v206, %v205
      %v209 = vld [vmem:[%s1] sm:$0xf]
      %v210 = vld [vmem:[%s1 + $0x4] sm:$0xf]
      %v211 = vlaneseq
      %v212 = vshrl.u32 %v211, 7
      %v213 = vsub.s32 0, %v212
      %v214 = vrot.slane %v202, %v213
      %v217 = vunpack.c.l.b16 %v209
      %v218 = vunpack.c.l.b16 %v210
      %v219 = vpack.c.b16 %v218, %v217
      %vm221 = vcmask 130048
      %v223 = vsel %vm221, %v207, 0
      %v226 = vsel %vm221, %v208, 0
      %228 = vmatprep.subr.bf16.mxu0 0
      %229 = vmatpush1.bf16.msra.mxu0 %v219
      %230 = vmatprep.subr.bf16.mxu0 0
      %231 = vmatpush1.bf16.msra.mxu0 0
      %232 = vmatprep.subr.bf16.mxu0 0
      %233 = vmatpush1.bf16.msra.mxu0 0
      %234 = vmatprep.subr.bf16.mxu0 0
      %235 = vmatpush1.bf16.msra.mxu0 0
      %236 = vmatprep.subr.bf16.mxu0 0
      %237 = vmatpush1.bf16.msra.mxu0 0
      %238 = vmatprep.subr.bf16.mxu0 0
      %239 = vmatpush1.bf16.msra.mxu0 0
      %240 = vmatprep.subr.bf16.mxu0 0
      %241 = vmatpush1.bf16.msra.mxu0 0
      %242 = vmatprep.subr.bf16.mxu0 0
      %243 = vmatpush1.bf16.msra.mxu0 0
      %244 = vmatprep.subr.bf16.mxu0 0
      %245 = vmatpush1.bf16.msra.mxu0 0
      %246 = vmatprep.subr.bf16.mxu0 0
      %247 = vmatpush1.bf16.msra.mxu0 0
      %248 = vmatprep.subr.bf16.mxu0 0
      %249 = vmatpush1.bf16.msra.mxu0 0
      %250 = vmatprep.subr.bf16.mxu0 0
      %251 = vmatpush1.bf16.msra.mxu0 0
      %252 = vmatprep.subr.bf16.mxu0 0
      %253 = vmatpush1.bf16.msra.mxu0 0
      %254 = vmatprep.subr.bf16.mxu0 0
      %255 = vmatpush1.bf16.msra.mxu0 0
      %256 = vmatprep.subr.bf16.mxu0 0
      %257 = vmatpush1.bf16.msra.mxu0 0
      %258 = vmatprep.subr.bf16.mxu0 0
      %259 = vmatpush1.bf16.msra.mxu0 0
      %260 = vmatprep.mubr.bf16.mxu0 0
      %261 = vmatmul.mubr.bf16.gmra.mrb[0].mxu0 %v223
      %v262 = vpop.f32.mrb[0].mxu0
      %v263 = vadd.f32 %v214, %v262
      %v264 = vpop.f32.mrb[0].mxu0
      %v265 = vpop.f32.mrb[0].mxu0
      %v266 = vadd.f32 %v214, %v265
      %v267 = vpop.f32.mrb[0].mxu0
      %268 = vmatprep.mubr.bf16.mxu0 0
      %269 = vmatmul.mubr.bf16.gmra.mrb[0].mxu0 %v226
      %v270 = vpop.f32.mrb[0].mxu0
      %v271 = vadd.f32 %v214, %v270
      %v272 = vpop.f32.mrb[0].mxu0
      %v273 = vpop.f32.mrb[0].mxu0
      %v274 = vadd.f32 %v214, %v273
      %v275 = vpop.f32.mrb[0].mxu0
      %276 = vdwg.mxu0
      %277 = vadd.xlane.f32.xlu0 %v263
      %v278 = vpop.xlane.xlu0 %277
      %279 = vadd.xlane.f32.xlu0 %v266
      %v280 = vpop.xlane.xlu0 %279
      %281 = vadd.xlane.f32.xlu0 %v271
      %v282 = vpop.xlane.xlu0 %281
      %283 = vadd.xlane.f32.xlu0 %v274
      %v284 = vpop.xlane.xlu0 %283
      %v285 = vmul.f32 %v263, %v263
      %v286 = vmul.f32 %v266, %v266
      %v287 = vmul.f32 %v271, %v271
      %v288 = vmul.f32 %v274, %v274
      %289 = vadd.xlane.f32.xlu0 %v285
      %v290 = vpop.xlane.xlu0 %289
      %291 = vadd.xlane.f32.xlu0 %v286
      %v292 = vpop.xlane.xlu0 %291
      %293 = vadd.xlane.f32.xlu0 %v287
      %v294 = vpop.xlane.xlu0 %293
      %295 = vadd.xlane.f32.xlu0 %v288
      %v296 = vpop.xlane.xlu0 %295
      %v297 = vmul.f32 %v278, 0.03125
      %v298 = vmul.f32 %v280, 0.03125
      %v299 = vmul.f32 %v282, 0.03125
      %v300 = vmul.f32 %v284, 0.03125
      %v301 = vmul.f32 %v290, 0.03125
      %v302 = vmul.f32 %v292, 0.03125
      %v303 = vmul.f32 %v294, 0.03125
      %v304 = vmul.f32 %v296, 0.03125
      %v305 = vmul.f32 %v297, %v297
      %v306 = vmul.f32 %v298, %v298
      %v307 = vmul.f32 %v299, %v299
      %v308 = vmul.f32 %v300, %v300
      %v309 = vsub.f32 %v301, %v305
      %v310 = vsub.f32 %v302, %v306
      %v311 = vsub.f32 %v303, %v307
      %v312 = vsub.f32 %v304, %v308
      %v313 = vadd.f32 %v309, 1e-05
      %v314 = vadd.f32 %v310, 1e-05
      %v315 = vadd.f32 %v311, 1e-05
      %v316 = vadd.f32 %v312, 1e-05
      %v317 = vrsqrt.pop %v313
      %v318 = vrsqrt.pop %v314
      %v319 = vrsqrt.pop %v315
      %v320 = vrsqrt.pop %v316
      %v321 = vsub.f32 %v263, %v297
      %v322 = vsub.f32 %v266, %v298
      %v323 = vsub.f32 %v271, %v299
      %v324 = vsub.f32 %v274, %v300
      %v325 = vlaneseq
      %v326 = vshrl.u32 %v325, 7
      %v327 = vsub.s32 2, %v326
      %v328 = vrot.slane %v202, %v327
      %v329 = vmul.f32 %v317, %v328
      %v330 = vmul.f32 %v318, %v328
      %v331 = vmul.f32 %v319, %v328
      %v332 = vmul.f32 %v320, %v328
      %v333 = vmul.f32 %v321, %v329
      %v334 = vmul.f32 %v322, %v330
      %v335 = vmul.f32 %v323, %v331
      %v336 = vmul.f32 %v324, %v332
      %v337 = vlaneseq
      %v338 = vshrl.u32 %v337, 7
      %v339 = vsub.s32 3, %v338
      %v340 = vrot.slane %v202, %v339
      %v341 = vadd.f32 %v333, %v340
      %v342 = vadd.f32 %v334, %v340
      %v343 = vadd.f32 %v335, %v340
      %v344 = vadd.f32 %v336, %v340
      %v345 = vmax.f32 %v341, 0.0
      %v346 = vmax.f32 %v342, 0.0
      %v347 = vmax.f32 %v343, 0.0
      %v348 = vmax.f32 %v344, 0.0
      %v349 = vpack.c.bf16 %v346, %v345
      %v350 = vpack.c.bf16 %v348, %v347
      %v351 = vld [vmem:[%s2] sm:$0xf]
      %v352 = vld [vmem:[%s2 + $0x4] sm:$0xf]
      %v353 = vld [vmem:[%s2 + $0x8] sm:$0xf]
      %v354 = vld [vmem:[%s2 + $0xc] sm:$0xf]
      %v355 = vld [vmem:[%s2 + $0x10] sm:$0xf]
      %v356 = vld [vmem:[%s2 + $0x14] sm:$0xf]
      %v357 = vld [vmem:[%s2 + $0x18] sm:$0xf]
      %v358 = vld [vmem:[%s2 + $0x1c] sm:$0xf]
      %v359 = vld [vmem:[%s2 + $0x20] sm:$0xf]
      %v360 = vld [vmem:[%s2 + $0x24] sm:$0xf]
      %v361 = vld [vmem:[%s2 + $0x28] sm:$0xf]
      %v362 = vld [vmem:[%s2 + $0x2c] sm:$0xf]
      %v363 = vld [vmem:[%s2 + $0x30] sm:$0xf]
      %v364 = vld [vmem:[%s2 + $0x34] sm:$0xf]
      %v365 = vld [vmem:[%s2 + $0x38] sm:$0xf]
      %v366 = vld [vmem:[%s2 + $0x3c] sm:$0xf]
      %v367 = vlaneseq
      %v368 = vshrl.u32 %v367, 7
      %v369 = vsub.s32 1, %v368
      %v370 = vrot.slane %v202, %v369
      %v387 = vunpack.c.l.b16 %v351
      %v388 = vunpack.c.l.b16 %v352
      %v389 = vunpack.c.l.b16 %v353
      %v390 = vunpack.c.l.b16 %v354
      %v391 = vunpack.c.l.b16 %v355
      %v392 = vunpack.c.l.b16 %v356
      %v393 = vunpack.c.l.b16 %v357
      %v394 = vunpack.c.l.b16 %v358
      %v395 = vunpack.c.l.b16 %v359
      %v396 = vunpack.c.l.b16 %v360
      %v397 = vunpack.c.l.b16 %v361
      %v398 = vunpack.c.l.b16 %v362
      %v399 = vunpack.c.l.b16 %v363
      %v400 = vunpack.c.l.b16 %v364
      %v401 = vunpack.c.l.b16 %v365
      %v402 = vunpack.c.l.b16 %v366
      %v403 = vpack.c.b16 %v388, %v387
      %v404 = vpack.c.b16 %v390, %v389
      %v405 = vpack.c.b16 %v392, %v391
      %v406 = vpack.c.b16 %v394, %v393
      %v407 = vpack.c.b16 %v396, %v395
      %v408 = vpack.c.b16 %v398, %v397
      %v409 = vpack.c.b16 %v400, %v399
      %v410 = vpack.c.b16 %v402, %v401
      %419 = vmatprep.subr.bf16.mxu0 0
      %420 = vmatpush1.bf16.msra.mxu0 %v403
      %421 = vmatprep.subr.bf16.mxu0 0
      %422 = vmatpush1.bf16.msra.mxu0 %v404
      %423 = vmatprep.subr.bf16.mxu0 0
      %424 = vmatpush1.bf16.msra.mxu0 %v405
      %425 = vmatprep.subr.bf16.mxu0 0
      %426 = vmatpush1.bf16.msra.mxu0 %v406
      %427 = vmatprep.subr.bf16.mxu0 0
      %428 = vmatpush1.bf16.msra.mxu0 %v407
      %429 = vmatprep.subr.bf16.mxu0 0
      %430 = vmatpush1.bf16.msra.mxu0 %v408
      %431 = vmatprep.subr.bf16.mxu0 0
      %432 = vmatpush1.bf16.msra.mxu0 %v409
      %433 = vmatprep.subr.bf16.mxu0 0
      %434 = vmatpush1.bf16.msra.mxu0 %v410
      %435 = vmatprep.subr.bf16.mxu0 0
      %436 = vmatpush1.bf16.msra.mxu0 0
      %437 = vmatprep.subr.bf16.mxu0 0
      %438 = vmatpush1.bf16.msra.mxu0 0
      %439 = vmatprep.subr.bf16.mxu0 0
      %440 = vmatpush1.bf16.msra.mxu0 0
      %441 = vmatprep.subr.bf16.mxu0 0
      %442 = vmatpush1.bf16.msra.mxu0 0
      %443 = vmatprep.subr.bf16.mxu0 0
      %444 = vmatpush1.bf16.msra.mxu0 0
      %445 = vmatprep.subr.bf16.mxu0 0
      %446 = vmatpush1.bf16.msra.mxu0 0
      %447 = vmatprep.subr.bf16.mxu0 0
      %448 = vmatpush1.bf16.msra.mxu0 0
      %449 = vmatprep.subr.bf16.mxu0 0
      %450 = vmatpush1.bf16.msra.mxu0 0
      %451 = vmatprep.mubr.bf16.mxu0 0
      %452 = vmatmul.mubr.bf16.gmra.mrb[0].mxu0 %v349
      %v453 = vpop.f32.mrb[0].mxu0
      %v454 = vadd.f32 %v370, %v453
      %v455 = vpop.f32.mrb[0].mxu0
      %v456 = vpop.f32.mrb[0].mxu0
      %v457 = vadd.f32 %v370, %v456
      %v458 = vpop.f32.mrb[0].mxu0
      %459 = vmatprep.mubr.bf16.mxu0 0
      %460 = vmatmul.mubr.bf16.gmra.mrb[0].mxu0 %v350
      %v461 = vpop.f32.mrb[0].mxu0
      %v462 = vadd.f32 %v370, %v461
      %v463 = vpop.f32.mrb[0].mxu0
      %v464 = vpop.f32.mrb[0].mxu0
      %v465 = vadd.f32 %v370, %v464
      %v466 = vpop.f32.mrb[0].mxu0
      %467 = vdwg.mxu0
      %468 = vadd.xlane.f32.xlu0 %v454
      %v469 = vpop.xlane.xlu0 %468
      %470 = vadd.xlane.f32.xlu0 %v457
      %v471 = vpop.xlane.xlu0 %470
      %472 = vadd.xlane.f32.xlu0 %v462
      %v473 = vpop.xlane.xlu0 %472
      %474 = vadd.xlane.f32.xlu0 %v465
      %v475 = vpop.xlane.xlu0 %474
      %v476 = vmul.f32 %v454, %v454
      %v477 = vmul.f32 %v457, %v457
      %v478 = vmul.f32 %v462, %v462
      %v479 = vmul.f32 %v465, %v465
      %480 = vadd.xlane.f32.xlu0 %v476
      %v481 = vpop.xlane.xlu0 %480
      %482 = vadd.xlane.f32.xlu0 %v477
      %v483 = vpop.xlane.xlu0 %482
      %484 = vadd.xlane.f32.xlu0 %v478
      %v485 = vpop.xlane.xlu0 %484
      %486 = vadd.xlane.f32.xlu0 %v479
      %v487 = vpop.xlane.xlu0 %486
      %v488 = vmul.f32 %v469, 0.03125
      %v489 = vmul.f32 %v471, 0.03125
      %v490 = vmul.f32 %v473, 0.03125
      %v491 = vmul.f32 %v475, 0.03125
      %v492 = vmul.f32 %v481, 0.03125
      %v493 = vmul.f32 %v483, 0.03125
      %v494 = vmul.f32 %v485, 0.03125
      %v495 = vmul.f32 %v487, 0.03125
      %v496 = vmul.f32 %v488, %v488
      %v497 = vmul.f32 %v489, %v489
      %v498 = vmul.f32 %v490, %v490
      %v499 = vmul.f32 %v491, %v491
      %v500 = vsub.f32 %v492, %v496
      %v501 = vsub.f32 %v493, %v497
      %v502 = vsub.f32 %v494, %v498
      %v503 = vsub.f32 %v495, %v499
      %v504 = vadd.f32 %v500, 1e-05
      %v505 = vadd.f32 %v501, 1e-05
      %v506 = vadd.f32 %v502, 1e-05
      %v507 = vadd.f32 %v503, 1e-05
      %v508 = vrsqrt.pop %v504
      %v509 = vrsqrt.pop %v505
      %v510 = vrsqrt.pop %v506
      %v511 = vrsqrt.pop %v507
      %v512 = vsub.f32 %v454, %v488
      %v513 = vsub.f32 %v457, %v489
      %v514 = vsub.f32 %v462, %v490
      %v515 = vsub.f32 %v465, %v491
      %v516 = vmul.f32 %v508, %v328
      %v517 = vmul.f32 %v509, %v328
      %v518 = vmul.f32 %v510, %v328
      %v519 = vmul.f32 %v511, %v328
      %v520 = vmul.f32 %v512, %v516
      %v521 = vmul.f32 %v513, %v517
      %v522 = vmul.f32 %v514, %v518
      %v523 = vmul.f32 %v515, %v519
      %v524 = vadd.f32 %v520, %v340
      %v525 = vadd.f32 %v521, %v340
      %v526 = vadd.f32 %v522, %v340
      %v527 = vadd.f32 %v523, %v340
      %v528 = vmax.f32 %v524, 0.0
      %v529 = vmax.f32 %v525, 0.0
      %v530 = vmax.f32 %v526, 0.0
      %v531 = vmax.f32 %v527, 0.0
      %vm532 = vcmask 261120
      %533 = vst.msk [vmem:[%s199] sm:$0xff] %vm532, %v528
      %534 = vst.msk [vmem:[%s199 + $0x8] sm:$0xff] %vm532, %v529
      %535 = vst.msk [vmem:[%s199 + $0x10] sm:$0xff] %vm532, %v530
      %536 = vst.msk [vmem:[%s199 + $0x18] sm:$0xff] %vm532, %v531
      %s537 = smul.u32 4, %s15
      %p538 = scmp.lt.s32.totalorder %s537, 7
      %s539 = scalar_select %p538, %s537, 7
      %s540 = smul.addr %s539, 8
      %s541 = scalar_lea.vmem %s4, %s540
      // Predicated region
      $region37: #{preprocessor_forward.1} parent=35 // pred_check
        %p542 = pneg %p122
      $region38: #{preprocessor_forward.1} parent=35 // pred_check_branch
        %544 = sbr.rel (%p542) target = $region40
      $region39: #{preprocessor_forward.1} parent=35 // pred_region
        %s545 = smul.u32 4, %s15
      $region40: #{preprocessor_forward.1} parent=35 // pred_fallthru
        _
    $region36: #{preprocessor_forward.1} parent=5 // pred_fallthru
      _
    %p546 = scmp.le.s32.totalorder 2, %s10
    // Predicated region
    $region41: #{preprocessor_forward.1} parent=5 // pred_check
      %p547 = pneg %p546
    $region42: #{preprocessor_forward.1} parent=5 // pred_check_branch
      %549 = sbr.rel (%p547) target = $region44
    $region43: #{preprocessor_forward.1} parent=5 // pred_region
      %s550 = ssub.s32 %s10, 2
      // Predicated region
      $region45: #{preprocessor_forward.1} parent=43 // pred_check
        %p551 = pneg %p128
      $region46: #{preprocessor_forward.1} parent=43 // pred_check_branch
        %553 = sbr.rel (%p551) target = $region48
      $region47: #{preprocessor_forward.1} parent=43 // pred_region
        %s554 = smul.u32 4, %s16
        %p555 = scmp.lt.s32.totalorder %s554, 7
        %s556 = scalar_select %p555, %s554, 7
        %s557 = smul.addr %s556, 8
        %s558 = scalar_lea.vmem %s4, %s557
      $region48: #{preprocessor_forward.1} parent=43 // pred_fallthru
        _
    $region44: #{preprocessor_forward.1} parent=5 // pred_fallthru
      _
  $region6: #{preprocessor_forward.1} parent=0 // loop_footer
    %s14 = sadd.s32 1, %s10
  $region7: #{preprocessor_forward.1} parent=0 // loop_footer_branch
    %9 = sbr.rel target = $region3
  $region8: #{preprocessor_forward.1} parent=0 // loop_exit
    _

</llo_original>
